<compile_context>
chip_gen: v7x
topology: tpu7x:2x2x1
jax: 0.10.0
libtpu: 0.0.40
codegen_flags: <defaults>
</compile_context>

<pallas_src>
import jax
import jax.numpy as jnp
from jax.experimental import pallas as pl
from jax.experimental.pallas import tpu as pltpu


def _upsample_kernel(x_ref, m_ref, b_ref, o_ref):
    """One (h-tile, batch) step of ConvTranspose2d(k=2, s=2), NCHW-native.

    x_ref : (1, Cin, tile_h, W)        input rows (NCHW slice)
    m_ref : (Cin, W, Cout*4W)          folded expansion+weight matrices
    b_ref : (1, Cout*4W)               bias, replicated along lanes (f32)
    o_ref : (1, Cout, tile_h, 4W)      output rows in the (B, Cout, H, 4W) view
    """
    cin = x_ref.shape[1]
    cout = o_ref.shape[1]
    w4 = o_ref.shape[3]

    # Whole conv-transpose on the MXU: acc[h, co*4W + j] =
    #   sum_ci sum_w x[ci, h, w] * weight[ci, co, kh(j), kw(j)] * [w == w_src(j)]
    acc = jnp.dot(x_ref[0, 0], m_ref[0], preferred_element_type=jnp.float32)
    for ci in range(1, cin):
        acc = acc + jnp.dot(x_ref[0, ci], m_ref[ci],
                            preferred_element_type=jnp.float32)
    acc = acc + b_ref[...]                                   # (tile_h, Cout*4W)

    # Per-channel stores; vreg-aligned & unmasked whenever 4W % 128 == 0.
    for co in range(cout):
        o_ref[0, co, :, :] = acc[:, co * w4:(co + 1) * w4].astype(o_ref.dtype)


def _round_up(v, m):
    return ((v + m - 1) // m) * m


def _pick_tile_h(H, Cin, Cout, W, x_isz, budget):
    """Largest h-tile whose blocks (incl. constants + f32 acc) fit `budget`."""
    W4 = 4 * W
    CW4 = Cout * W4
    per_row = (2 * Cin * _round_up(W, 128) * x_isz          # x block (double-buffered)
               + 2 * Cout * _round_up(W4, 128) * x_isz      # out block (double-buffered)
               + _round_up(CW4, 128) * 4)                   # f32 accumulator
    const = (2 * Cin * _round_up(W, 8) * _round_up(CW4, 128) * x_isz   # M block
             + 2 * _round_up(1, 8) * _round_up(CW4, 128) * 4)          # bias block
    if H <= 8:
        return H
    t = max(8, (((budget - const) // per_row) // 8) * 8)
    return min(H, t)


def _vmem_limit_bytes():
    """Generation-aware scoped-VMEM limit (v7x has only 64 MiB physical)."""
    try:
        cap = pltpu.get_tpu_info().vmem_capacity_bytes
    except Exception:
        cap = 64 * 1024 * 1024          # conservative (v7x-sized) fallback
    return min((cap * 3) // 4, 64 * 1024 * 1024)


def upsample_conv_transpose2x2(x_nchw, weight, bias):
    """ConvTranspose2d(kernel_size=2, stride=2), NCHW in / NCHW out.

    x_nchw : (B, Cin, H, W)
    weight : (Cin, Cout, 2, 2)   -- PyTorch ConvTranspose2d weight layout
    bias   : (Cout,)
    returns: (B, Cout, 2H, 2W)
    """
    B, Cin, H, W = x_nchw.shape
    Cout = weight.shape[1]
    W2, W4 = 2 * W, 4 * W
    CW4 = Cout * W4
    dtype = x_nchw.dtype
    isz = jnp.dtype(dtype).itemsize

    # --- tiny host-side constants (no passes over the big tensors) ----------
    j = jnp.arange(W4)
    kh_idx = j // W2                      # output-row parity (2h + kh)
    kw_idx = j % 2                        # output-col parity (2w + kw)
    w_src = (j % W2) // 2                 # source input column
    d = (w_src[None, :] == jnp.arange(W)[:, None]).astype(jnp.float32)  # (W, 4W)
    wlane = weight.astype(jnp.float32)[:, :, kh_idx, kw_idx]            # (Cin, Cout, 4W)
    # Folded matrix: M[ci, w, co*4W + j] = d[w, j] * weight[ci, co, kh(j), kw(j)]
    m = (d[None, :, None, :] * wlane[:, None, :, :]).reshape(Cin, W, CW4)
    m = m.astype(dtype)                                                  # bf16-friendly
    bflat = jnp.repeat(bias.astype(jnp.float32), W4).reshape(1, CW4)     # f32 bias

    # --- tiling / VMEM budget ------------------------------------------------
    vmem_limit = _vmem_limit_bytes()
    block_budget = (vmem_limit * 2) // 5     # headroom for Pallas internals
    tile_h = _pick_tile_h(H, Cin, Cout, W, max(isz, 2), block_budget)
    num_h = pl.cdiv(H, tile_h)

    # Put the larger parallel extent first so megacore (v7x) splits it evenly.
    h_major = num_h >= B
    if h_major:
        grid = (num_h, B)
        xo_map = lambda i, b: (b, 0, i, 0)
        m_map = lambda i, b: (0, 0, 0)
        b_map = lambda i, b: (0, 0)
    else:
        grid = (B, num_h)
        xo_map = lambda b, i: (b, 0, i, 0)
        m_map = lambda b, i: (0, 0, 0)
        b_map = lambda b, i: (0, 0)

    out_bytes = B * Cout * 4 * H * W * isz
    cost = pl.CostEstimate(
        flops=2 * B * H * Cin * W * CW4,     # folded expansion + conv-transpose matmuls
        transcendentals=0,
        bytes_accessed=int(x_nchw.size * isz + out_bytes
                           + m.size * isz + bflat.size * 4),
    )

    out4 = pl.pallas_call(
        _upsample_kernel,
        out_shape=jax.ShapeDtypeStruct((B, Cout, H, W4), dtype),
        grid_spec=pltpu.PrefetchScalarGridSpec(
            num_scalar_prefetch=0,
            grid=grid,
            in_specs=[
                pl.BlockSpec((1, Cin, tile_h, W), xo_map),
                pl.BlockSpec((Cin, W, CW4), m_map),
                pl.BlockSpec((1, CW4), b_map),
            ],
            out_specs=pl.BlockSpec((1, Cout, tile_h, W4), xo_map),
        ),
        compiler_params=pltpu.CompilerParams(
            dimension_semantics=("parallel", "parallel"),
            vmem_limit_bytes=int(vmem_limit),
        ),
        cost_estimate=cost,
    )(x_nchw, m, bflat)

    # Free reshape: (B, Cout, H, 4W) -> (B, Cout, 2H, 2W). No transpose.
    return out4.reshape(B, Cout, 2 * H, 2 * W)


def _reference_upsample(x_nchw, weight, bias):
    """Pure-JAX reference of ConvTranspose2d(k=2, s=2) in NCHW."""
    B, Cin, H, W = x_nchw.shape
    Cout = weight.shape[1]
    patches = jnp.einsum("bchw,cokl->bhwklo", x_nchw, weight)   # (B,H,W,kh,kw,Cout)
    patches = jnp.transpose(patches, (0, 1, 3, 2, 4, 5)).reshape(B, 2 * H, 2 * W, Cout)
    return jnp.transpose(patches, (0, 3, 1, 2)) + bias[None, :, None, None]


if __name__ == "__main__":
    key = jax.random.PRNGKey(0)
    kx, kw_, kb = jax.random.split(key, 3)

    B, Cin, Cout, H, W = 2, 4, 8, 16, 16

    x = jax.random.normal(kx, (B, Cin, H, W), dtype=jnp.float32)
    weight = jax.random.normal(kw_, (Cin, Cout, 2, 2), dtype=jnp.float32) * 0.1
    bias = jax.random.normal(kb, (Cout,), dtype=jnp.float32) * 0.1

    out = jax.block_until_ready(upsample_conv_transpose2x2(x, weight, bias))
    ref = _reference_upsample(x, weight, bias)

    assert out.shape == (B, Cout, 2 * H, 2 * W), out.shape
    assert jnp.allclose(out, ref, atol=1e-5, rtol=1e-5), "mismatch vs reference"

    print("KERNEL_OK")
</pallas_src>

<mosaic_0001>
module attributes {stable_mosaic.version = 11 : i64} {
  func.func @_upsample_kernel(%arg0: i32, %arg1: i32, %arg2: memref<1x4x16x16xf32, #tpu.memory_space<vmem>>, %arg3: memref<4x16x512xf32, #tpu.memory_space<vmem>>, %arg4: memref<1x512xf32, #tpu.memory_space<vmem>>, %arg5: memref<1x8x16x64xf32, #tpu.memory_space<vmem>>) attributes {dimension_semantics = [#tpu.dimension_semantics<parallel>, #tpu.dimension_semantics<parallel>], iteration_bounds = array<i64: 2, 1>, scalar_prefetch = 0 : i64, scratch_operands = 0 : i64, tpu.core_type = #tpu.core_type<tc>, window_params = [{transform_indices = @transform_0, window_bounds = array<i64: 1, 4, 16, 16>}, {pipeline_mode = #tpu.pipeline_mode<synchronous>, transform_indices = @transform_1, window_bounds = array<i64: 4, 16, 512>}, {pipeline_mode = #tpu.pipeline_mode<synchronous>, transform_indices = @transform_2, window_bounds = array<i64: 1, 512>}, {transform_indices = @transform_3, window_bounds = array<i64: 1, 8, 16, 64>}]} {
    %c0 = arith.constant 0 : index
    %c0_0 = arith.constant 0 : index
    %c0_1 = arith.constant 0 : index
    %c0_2 = arith.constant 0 : index
    %0 = vector.load %arg2[%c0, %c0_0, %c0_1, %c0_2] : memref<1x4x16x16xf32, #tpu.memory_space<vmem>>, vector<1x1x16x16xf32>
    %1 = vector.shape_cast %0 : vector<1x1x16x16xf32> to vector<16x16xf32>
    %c0_3 = arith.constant 0 : index
    %c0_4 = arith.constant 0 : index
    %c0_5 = arith.constant 0 : index
    %2 = vector.load %arg3[%c0_3, %c0_4, %c0_5] : memref<4x16x512xf32, #tpu.memory_space<vmem>>, vector<1x16x512xf32>
    %3 = vector.shape_cast %2 : vector<1x16x512xf32> to vector<16x512xf32>
    %cst = arith.constant dense<0.000000e+00> : vector<16x512xf32>
    %4 = tpu.matmul %1, %3, %cst {dimension_numbers = #tpu.dot_dimension_numbers<[1], [0], [0], [1], [0, 0, 1, 1], [], []>} : vector<16x16xf32>, vector<16x512xf32>, vector<16x512xf32> -> vector<16x512xf32>
    %c0_6 = arith.constant 0 : index
    %c1 = arith.constant 1 : index
    %c0_7 = arith.constant 0 : index
    %c0_8 = arith.constant 0 : index
    %5 = vector.load %arg2[%c0_6, %c1, %c0_7, %c0_8] : memref<1x4x16x16xf32, #tpu.memory_space<vmem>>, vector<1x1x16x16xf32>
    %6 = vector.shape_cast %5 : vector<1x1x16x16xf32> to vector<16x16xf32>
    %c1_9 = arith.constant 1 : index
    %c0_10 = arith.constant 0 : index
    %c0_11 = arith.constant 0 : index
    %7 = vector.load %arg3[%c1_9, %c0_10, %c0_11] : memref<4x16x512xf32, #tpu.memory_space<vmem>>, vector<1x16x512xf32>
    %8 = vector.shape_cast %7 : vector<1x16x512xf32> to vector<16x512xf32>
    %cst_12 = arith.constant dense<0.000000e+00> : vector<16x512xf32>
    %9 = tpu.matmul %6, %8, %cst_12 {dimension_numbers = #tpu.dot_dimension_numbers<[1], [0], [0], [1], [0, 0, 1, 1], [], []>} : vector<16x16xf32>, vector<16x512xf32>, vector<16x512xf32> -> vector<16x512xf32>
    %10 = arith.addf %4, %9 : vector<16x512xf32>
    %c0_13 = arith.constant 0 : index
    %c2 = arith.constant 2 : index
    %c0_14 = arith.constant 0 : index
    %c0_15 = arith.constant 0 : index
    %11 = vector.load %arg2[%c0_13, %c2, %c0_14, %c0_15] : memref<1x4x16x16xf32, #tpu.memory_space<vmem>>, vector<1x1x16x16xf32>
    %12 = vector.shape_cast %11 : vector<1x1x16x16xf32> to vector<16x16xf32>
    %c2_16 = arith.constant 2 : index
    %c0_17 = arith.constant 0 : index
    %c0_18 = arith.constant 0 : index
    %13 = vector.load %arg3[%c2_16, %c0_17, %c0_18] : memref<4x16x512xf32, #tpu.memory_space<vmem>>, vector<1x16x512xf32>
    %14 = vector.shape_cast %13 : vector<1x16x512xf32> to vector<16x512xf32>
    %cst_19 = arith.constant dense<0.000000e+00> : vector<16x512xf32>
    %15 = tpu.matmul %12, %14, %cst_19 {dimension_numbers = #tpu.dot_dimension_numbers<[1], [0], [0], [1], [0, 0, 1, 1], [], []>} : vector<16x16xf32>, vector<16x512xf32>, vector<16x512xf32> -> vector<16x512xf32>
    %16 = arith.addf %10, %15 : vector<16x512xf32>
    %c0_20 = arith.constant 0 : index
    %c3 = arith.constant 3 : index
    %c0_21 = arith.constant 0 : index
    %c0_22 = arith.constant 0 : index
    %17 = vector.load %arg2[%c0_20, %c3, %c0_21, %c0_22] : memref<1x4x16x16xf32, #tpu.memory_space<vmem>>, vector<1x1x16x16xf32>
    %18 = vector.shape_cast %17 : vector<1x1x16x16xf32> to vector<16x16xf32>
    %c3_23 = arith.constant 3 : index
    %c0_24 = arith.constant 0 : index
    %c0_25 = arith.constant 0 : index
    %19 = vector.load %arg3[%c3_23, %c0_24, %c0_25] : memref<4x16x512xf32, #tpu.memory_space<vmem>>, vector<1x16x512xf32>
    %20 = vector.shape_cast %19 : vector<1x16x512xf32> to vector<16x512xf32>
    %cst_26 = arith.constant dense<0.000000e+00> : vector<16x512xf32>
    %21 = tpu.matmul %18, %20, %cst_26 {dimension_numbers = #tpu.dot_dimension_numbers<[1], [0], [0], [1], [0, 0, 1, 1], [], []>} : vector<16x16xf32>, vector<16x512xf32>, vector<16x512xf32> -> vector<16x512xf32>
    %22 = arith.addf %16, %21 : vector<16x512xf32>
    %c0_27 = arith.constant 0 : index
    %c0_28 = arith.constant 0 : index
    %23 = vector.load %arg4[%c0_27, %c0_28] : memref<1x512xf32, #tpu.memory_space<vmem>>, vector<1x512xf32>
    %24 = vector.broadcast %23 : vector<1x512xf32> to vector<16x512xf32>
    %25 = arith.addf %22, %24 : vector<16x512xf32>
    %26 = vector.extract_strided_slice %25 {offsets = [0, 0], sizes = [16, 64], strides = [1, 1]} : vector<16x512xf32> to vector<16x64xf32>
    %c0_29 = arith.constant 0 : index
    %c0_30 = arith.constant 0 : index
    %c0_31 = arith.constant 0 : index
    %c0_32 = arith.constant 0 : index
    %27 = vector.load %arg5[%c0_29, %c0_30, %c0_31, %c0_32] : memref<1x8x16x64xf32, #tpu.memory_space<vmem>>, vector<1x1x16x64xf32>
    %28 = vector.shape_cast %27 : vector<1x1x16x64xf32> to vector<16x64xf32>
    %29 = vector.shape_cast %26 : vector<16x64xf32> to vector<1x1x16x64xf32>
    tpu.vector_store %arg5[%c0_29, %c0_30, %c0_31, %c0_32], %29 {strides = array<i32>} : memref<1x8x16x64xf32, #tpu.memory_space<vmem>>, vector<1x1x16x64xf32>,
    %30 = vector.extract_strided_slice %25 {offsets = [0, 64], sizes = [16, 64], strides = [1, 1]} : vector<16x512xf32> to vector<16x64xf32>
    %c0_33 = arith.constant 0 : index
    %c1_34 = arith.constant 1 : index
    %c0_35 = arith.constant 0 : index
    %c0_36 = arith.constant 0 : index
    %31 = vector.load %arg5[%c0_33, %c1_34, %c0_35, %c0_36] : memref<1x8x16x64xf32, #tpu.memory_space<vmem>>, vector<1x1x16x64xf32>
    %32 = vector.shape_cast %31 : vector<1x1x16x64xf32> to vector<16x64xf32>
    %33 = vector.shape_cast %30 : vector<16x64xf32> to vector<1x1x16x64xf32>
    tpu.vector_store %arg5[%c0_33, %c1_34, %c0_35, %c0_36], %33 {strides = array<i32>} : memref<1x8x16x64xf32, #tpu.memory_space<vmem>>, vector<1x1x16x64xf32>,
    %34 = vector.extract_strided_slice %25 {offsets = [0, 128], sizes = [16, 64], strides = [1, 1]} : vector<16x512xf32> to vector<16x64xf32>
    %c0_37 = arith.constant 0 : index
    %c2_38 = arith.constant 2 : index
    %c0_39 = arith.constant 0 : index
    %c0_40 = arith.constant 0 : index
    %35 = vector.load %arg5[%c0_37, %c2_38, %c0_39, %c0_40] : memref<1x8x16x64xf32, #tpu.memory_space<vmem>>, vector<1x1x16x64xf32>
    %36 = vector.shape_cast %35 : vector<1x1x16x64xf32> to vector<16x64xf32>
    %37 = vector.shape_cast %34 : vector<16x64xf32> to vector<1x1x16x64xf32>
    tpu.vector_store %arg5[%c0_37, %c2_38, %c0_39, %c0_40], %37 {strides = array<i32>} : memref<1x8x16x64xf32, #tpu.memory_space<vmem>>, vector<1x1x16x64xf32>,
    %38 = vector.extract_strided_slice %25 {offsets = [0, 192], sizes = [16, 64], strides = [1, 1]} : vector<16x512xf32> to vector<16x64xf32>
    %c0_41 = arith.constant 0 : index
    %c3_42 = arith.constant 3 : index
    %c0_43 = arith.constant 0 : index
    %c0_44 = arith.constant 0 : index
    %39 = vector.load %arg5[%c0_41, %c3_42, %c0_43, %c0_44] : memref<1x8x16x64xf32, #tpu.memory_space<vmem>>, vector<1x1x16x64xf32>
    %40 = vector.shape_cast %39 : vector<1x1x16x64xf32> to vector<16x64xf32>
    %41 = vector.shape_cast %38 : vector<16x64xf32> to vector<1x1x16x64xf32>
    tpu.vector_store %arg5[%c0_41, %c3_42, %c0_43, %c0_44], %41 {strides = array<i32>} : memref<1x8x16x64xf32, #tpu.memory_space<vmem>>, vector<1x1x16x64xf32>,
    %42 = vector.extract_strided_slice %25 {offsets = [0, 256], sizes = [16, 64], strides = [1, 1]} : vector<16x512xf32> to vector<16x64xf32>
    %c0_45 = arith.constant 0 : index
    %c4 = arith.constant 4 : index
    %c0_46 = arith.constant 0 : index
    %c0_47 = arith.constant 0 : index
    %43 = vector.load %arg5[%c0_45, %c4, %c0_46, %c0_47] : memref<1x8x16x64xf32, #tpu.memory_space<vmem>>, vector<1x1x16x64xf32>
    %44 = vector.shape_cast %43 : vector<1x1x16x64xf32> to vector<16x64xf32>
    %45 = vector.shape_cast %42 : vector<16x64xf32> to vector<1x1x16x64xf32>
    tpu.vector_store %arg5[%c0_45, %c4, %c0_46, %c0_47], %45 {strides = array<i32>} : memref<1x8x16x64xf32, #tpu.memory_space<vmem>>, vector<1x1x16x64xf32>,
    %46 = vector.extract_strided_slice %25 {offsets = [0, 320], sizes = [16, 64], strides = [1, 1]} : vector<16x512xf32> to vector<16x64xf32>
    %c0_48 = arith.constant 0 : index
    %c5 = arith.constant 5 : index
    %c0_49 = arith.constant 0 : index
    %c0_50 = arith.constant 0 : index
    %47 = vector.load %arg5[%c0_48, %c5, %c0_49, %c0_50] : memref<1x8x16x64xf32, #tpu.memory_space<vmem>>, vector<1x1x16x64xf32>
    %48 = vector.shape_cast %47 : vector<1x1x16x64xf32> to vector<16x64xf32>
    %49 = vector.shape_cast %46 : vector<16x64xf32> to vector<1x1x16x64xf32>
    tpu.vector_store %arg5[%c0_48, %c5, %c0_49, %c0_50], %49 {strides = array<i32>} : memref<1x8x16x64xf32, #tpu.memory_space<vmem>>, vector<1x1x16x64xf32>,
    %50 = vector.extract_strided_slice %25 {offsets = [0, 384], sizes = [16, 64], strides = [1, 1]} : vector<16x512xf32> to vector<16x64xf32>
    %c0_51 = arith.constant 0 : index
    %c6 = arith.constant 6 : index
    %c0_52 = arith.constant 0 : index
    %c0_53 = arith.constant 0 : index
    %51 = vector.load %arg5[%c0_51, %c6, %c0_52, %c0_53] : memref<1x8x16x64xf32, #tpu.memory_space<vmem>>, vector<1x1x16x64xf32>
    %52 = vector.shape_cast %51 : vector<1x1x16x64xf32> to vector<16x64xf32>
    %53 = vector.shape_cast %50 : vector<16x64xf32> to vector<1x1x16x64xf32>
    tpu.vector_store %arg5[%c0_51, %c6, %c0_52, %c0_53], %53 {strides = array<i32>} : memref<1x8x16x64xf32, #tpu.memory_space<vmem>>, vector<1x1x16x64xf32>,
    %54 = vector.extract_strided_slice %25 {offsets = [0, 448], sizes = [16, 64], strides = [1, 1]} : vector<16x512xf32> to vector<16x64xf32>
    %c0_54 = arith.constant 0 : index
    %c7 = arith.constant 7 : index
    %c0_55 = arith.constant 0 : index
    %c0_56 = arith.constant 0 : index
    %55 = vector.load %arg5[%c0_54, %c7, %c0_55, %c0_56] : memref<1x8x16x64xf32, #tpu.memory_space<vmem>>, vector<1x1x16x64xf32>
    %56 = vector.shape_cast %55 : vector<1x1x16x64xf32> to vector<16x64xf32>
    %57 = vector.shape_cast %54 : vector<16x64xf32> to vector<1x1x16x64xf32>
    tpu.vector_store %arg5[%c0_54, %c7, %c0_55, %c0_56], %57 {strides = array<i32>} : memref<1x8x16x64xf32, #tpu.memory_space<vmem>>, vector<1x1x16x64xf32>,
    return
  }
  func.func @transform_0(%arg0: i32, %arg1: i32) -> (i32, i32, i32, i32) {
    %c0_i32 = arith.constant 0 : i32
    %c0_i32_0 = arith.constant 0 : i32
    %c0_i32_1 = arith.constant 0 : i32
    return %arg0, %c0_i32, %arg1, %c0_i32_0 : i32, i32, i32, i32
  }
  func.func @transform_1(%arg0: i32, %arg1: i32) -> (i32, i32, i32) {
    %c0_i32 = arith.constant 0 : i32
    %c0_i32_0 = arith.constant 0 : i32
    %c0_i32_1 = arith.constant 0 : i32
    %c0_i32_2 = arith.constant 0 : i32
    return %c0_i32, %c0_i32_0, %c0_i32_1 : i32, i32, i32
  }
  func.func @transform_2(%arg0: i32, %arg1: i32) -> (i32, i32) {
    %c0_i32 = arith.constant 0 : i32
    %c0_i32_0 = arith.constant 0 : i32
    %c0_i32_1 = arith.constant 0 : i32
    return %c0_i32, %c0_i32_0 : i32, i32
  }
  func.func @transform_3(%arg0: i32, %arg1: i32) -> (i32, i32, i32, i32) {
    %c0_i32 = arith.constant 0 : i32
    %c0_i32_0 = arith.constant 0 : i32
    %c0_i32_1 = arith.constant 0 : i32
    return %arg0, %c0_i32, %arg1, %c0_i32_0 : i32, i32, i32, i32
  }
}

</mosaic_0001>

<llo_original>
// kernel: tpu_custom_call.1
$region0: #{tpu_custom_call.1}
  #allocation0 [shape = 'u32[]', space=smem, size = 0x4, offset = 0x4, fixed_abs, tag = 'smem constant byte address 0x4 - core index']
  #allocation1 [shape = 'u32[144,128]{1,0:T(1,128)}', space=vmem, size = 0x12000, scoped, tag = 'internal scratch']
  %s0 = inlined_call_operand.hbm [shape: f32[2,4,16,16], index: 0, kind: input, shape index: {}]
  %s1 = inlined_call_operand.hbm [shape: f32[4,16,512], index: 1, kind: input, shape index: {}]
  %s2 = inlined_call_operand.vmem [shape: f32[1,512], index: 2, kind: input, shape index: {}]
  %s3 = inlined_call_operand.hbm [shape: f32[2,8,16,64], index: 3, kind: output, shape index: {}]
  %s4 = sld [smem:[#allocation0]]
  $region53: #{tpu_custom_call.1} parent=0
    _
  %s6 = ssub.s32 1, %s4
  %s7 = scalar_select 0, %s6, %s4
  $region1: #{tpu_custom_call.1} parent=0
    #allocation2 [shape = 'u8[65536]{0}', space=vmem, size = 0x10000, scoped, tag = 'input window, operand 0']
    #allocation3 [shape = 's32[2]{0}', space=sflag, size = 0x8, scoped, tag = 'scoped memory for tpu_custom_call.1']
    #allocation4 [shape = 's32[2]{0}', space=sflag, size = 0x8, scoped, tag = 'scoped memory for tpu_custom_call.1']
    #allocation5 [shape = 'u8[131072]{0}', space=vmem, size = 0x20000, scoped, tag = 'input window, operand 1, single buffered']
    #allocation6 [shape = 's32[1]{0}', space=sflag, size = 0x4, scoped, tag = 'scoped memory for tpu_custom_call.1']
    #allocation7 [shape = 'u8[131072]{0}', space=vmem, size = 0x20000, scoped, tag = 'output window, operand 0']
    %8 = vsyncpa [#allocation3], 0
    %s9 = scalar_lea.sflag [#allocation3], 1
    %10 = vsyncpa %s9, 0
    %11 = vsyncpa [#allocation6], 0
    %12 = vsyncpa [#allocation4], 0
    %s13 = scalar_lea.sflag [#allocation4], 1
    %14 = vsyncpa %s13, 0
    loop: start=0, step=1, limit=4
    $region2: #{tpu_custom_call.1} parent=1 // loop_pre_header
      _
    $region3: #{tpu_custom_call.1} parent=1 // loop_header
      %s16 = sphi 0, %s20
      %p17 = scmp.ge.s32.totalorder %s16, 4
      %s23 = sphi 0, %s35
      %s24 = sphi 0, %s31
      %s25 = sphi 0, %s23
      %s26 = sphi 0, %s24
      %s27 = sphi 0, %s25
      %s28 = sphi 0, %s26
      %s40 = sphi 0, %s42
      %s43 = sphi 0, %s40
      %s44 = sphi 0, %s43
      %s60 = sphi 0, %s44
      %s64 = sphi 0, %s64
      %s66 = sphi 0, %s64
      %s67 = sphi 0, %s66
      %s81 = sphi 0, %s67
      %s85 = sphi 0, %s85
      %s87 = sphi 0, %s85
      %s88 = sphi 0, %s87
      %s102 = sphi 0, %s88
      %s110 = sphi 0, %s112
      %s113 = sphi 0, %s110
      %s114 = sphi 0, %s113
      %s130 = sphi 0, %s114
    $region4: #{tpu_custom_call.1} parent=1 // loop_header_branch
      %19 = sbr.rel (%p17) target = $region8
    $region5: #{tpu_custom_call.1} parent=1 // loop_body
      %s21 = ssub.s32 %s16, 1
      %s22 = ssub.s32 %s16, 2
      %s29 = sadd.s32 1, %s24
      %p30 = scmp.ge.s32.totalorder %s29, 1
      %s31 = scalar_select %p30, 0, %s29
      %s32 = sadd.s32 1, %s23
      %s33 = scalar_select %p30, %s32, %s23
      %p34 = scmp.ge.s32.totalorder %s33, 2
      %s35 = scalar_select %p34, 0, %s33
      %s36 = ssub.s32 %s23, %s35
      %s37 = ssub.s32 %s24, %s31
      %s38 = sor.u32 %s36, %s37
      %p39 = scmp.eq.s32.totalorder %s38, 0
      %s41 = sadd.s32 %s40, 1
      %s42 = scalar_select %p39, %s40, %s41
      %p45 = pneg %p39
      %p46 = scmp.eq.s32.totalorder %s16, 1
      %p47 = por %p45, %p46
      %p48 = scmp.ne.s32.totalorder %s40, %s43
      %p49 = scmp.eq.s32.totalorder %s16, 0
      %p50 = por %p48, %p49
      %p51 = scmp.ne.s32.totalorder %s40, %s43
      %p52 = scmp.eq.s32.totalorder %s21, 1
      %p53 = por %p51, %p52
      %p54 = scmp.ne.s32.totalorder %s43, %s44
      %p55 = scmp.eq.s32.totalorder %s21, 0
      %p56 = por %p54, %p55
      %p57 = scmp.ne.s32.totalorder %s43, %s44
      %p58 = scmp.eq.s32.totalorder %s22, 1
      %p59 = por %p57, %p58
      %p61 = scmp.ne.s32.totalorder %s44, %s60
      %p62 = scmp.eq.s32.totalorder %s22, 0
      %p63 = por %p61, %p62
      %s65 = sadd.s32 %s64, 1
      %p68 = scmp.eq.s32.totalorder %s16, 1
      %p69 = scmp.ne.s32.totalorder %s64, %s66
      %p70 = scmp.eq.s32.totalorder %s16, 0
      %p71 = por %p69, %p70
      %p72 = scmp.ne.s32.totalorder %s64, %s66
      %p73 = scmp.eq.s32.totalorder %s21, 1
      %p74 = por %p72, %p73
      %p75 = scmp.ne.s32.totalorder %s66, %s67
      %p76 = scmp.eq.s32.totalorder %s21, 0
      %p77 = por %p75, %p76
      %p78 = scmp.ne.s32.totalorder %s66, %s67
      %p79 = scmp.eq.s32.totalorder %s22, 1
      %p80 = por %p78, %p79
      %p82 = scmp.ne.s32.totalorder %s67, %s81
      %p83 = scmp.eq.s32.totalorder %s22, 0
      %p84 = por %p82, %p83
      %s86 = sadd.s32 %s85, 1
      %p89 = scmp.eq.s32.totalorder %s16, 1
      %p90 = scmp.ne.s32.totalorder %s85, %s87
      %p91 = scmp.eq.s32.totalorder %s16, 0
      %p92 = por %p90, %p91
      %p93 = scmp.ne.s32.totalorder %s85, %s87
      %p94 = scmp.eq.s32.totalorder %s21, 1
      %p95 = por %p93, %p94
      %p96 = scmp.ne.s32.totalorder %s87, %s88
      %p97 = scmp.eq.s32.totalorder %s21, 0
      %p98 = por %p96, %p97
      %p99 = scmp.ne.s32.totalorder %s87, %s88
      %p100 = scmp.eq.s32.totalorder %s22, 1
      %p101 = por %p99, %p100
      %p103 = scmp.ne.s32.totalorder %s88, %s102
      %p104 = scmp.eq.s32.totalorder %s22, 0
      %p105 = por %p103, %p104
      %s106 = ssub.s32 %s23, %s35
      %s107 = ssub.s32 %s24, %s31
      %s108 = sor.u32 %s106, %s107
      %p109 = scmp.eq.s32.totalorder %s108, 0
      %s111 = sadd.s32 %s110, 1
      %s112 = scalar_select %p109, %s110, %s111
      %p115 = pneg %p109
      %p116 = scmp.eq.s32.totalorder %s16, 1
      %p117 = por %p115, %p116
      %p118 = scmp.ne.s32.totalorder %s110, %s113
      %p119 = scmp.eq.s32.totalorder %s16, 0
      %p120 = por %p118, %p119
      %p121 = scmp.ne.s32.totalorder %s110, %s113
      %p122 = scmp.eq.s32.totalorder %s21, 1
      %p123 = por %p121, %p122
      %p124 = scmp.ne.s32.totalorder %s113, %s114
      %p125 = scmp.eq.s32.totalorder %s21, 0
      %p126 = por %p124, %p125
      %p127 = scmp.ne.s32.totalorder %s113, %s114
      %p128 = scmp.eq.s32.totalorder %s22, 1
      %p129 = por %p127, %p128
      %p131 = scmp.ne.s32.totalorder %s114, %s130
      %p132 = scmp.eq.s32.totalorder %s22, 0
      %p133 = por %p131, %p132
      %p134 = scmp.le.s32.totalorder 1, %s16
      %p135 = scmp.lt.s32.totalorder %s16, 3
      %p136 = pnand %p134, %p135
      %p137 = pneg %p136
      // Predicated region
      $region9: #{tpu_custom_call.1} parent=5 // pred_check
        _
      $region10: #{tpu_custom_call.1} parent=5 // pred_check_branch
        %139 = sbr.rel (%p136) target = $region12
      $region11: #{tpu_custom_call.1} parent=5 // pred_region
        %s140 = ssub.s32 %s16, 1
        // Predicated region
        $region13: #{tpu_custom_call.1} parent=11 // pred_check
          %p141 = pneg %p77
        $region14: #{tpu_custom_call.1} parent=11 // pred_check_branch
          %143 = sbr.rel (%p141) target = $region16
        $region15: #{tpu_custom_call.1} parent=11 // pred_region
          %s145 = ssub.s32 4096, 4096
          %146 = vsyncadd [#allocation6], %s145
          %s147 = sshll.u32 [#allocation5], 4
          %s148 = int_to_ptr.vmem [resolvable:$true] %s147
          %153 = dma.hbm_to_vmem [thread:$0]  %s1, 4096, %s148, [#allocation6], 512, 512, 32
        $region16: #{tpu_custom_call.1} parent=11 // pred_fallthru
          _
        // Predicated region
        $region17: #{tpu_custom_call.1} parent=11 // pred_check
          %p154 = pneg %p98
        $region18: #{tpu_custom_call.1} parent=11 // pred_check_branch
          %156 = sbr.rel (%p154) target = $region20
        $region19: #{tpu_custom_call.1} parent=11 // pred_region
          _
        $region20: #{tpu_custom_call.1} parent=11 // pred_fallthru
          _
      $region12: #{tpu_custom_call.1} parent=5 // pred_fallthru
        _
      %p157 = scmp.lt.s32.totalorder %s16, 2
      // Predicated region
      $region21: #{tpu_custom_call.1} parent=5 // pred_check
        %p158 = pneg %p157
      $region22: #{tpu_custom_call.1} parent=5 // pred_check_branch
        %160 = sbr.rel (%p158) target = $region24
      $region23: #{tpu_custom_call.1} parent=5 // pred_region
        // Predicated region
        $region25: #{tpu_custom_call.1} parent=23 // pred_check
          %p161 = pneg %p50
        $region26: #{tpu_custom_call.1} parent=23 // pred_check_branch
          %163 = sbr.rel (%p161) target = $region28
        $region27: #{tpu_custom_call.1} parent=23 // pred_region
          %s164 = sand.u32 %s40, 1
          %s165 = scalar_lea.sflag [#allocation3], %s164
          %s166 = sand.u32 %s40, 1
          %s167 = smul.addr %s166, 64
          %s168 = scalar_lea.vmem [#allocation2], %s167
          %s169 = smul.u32 2, %s24
          %s171 = ssub.s32 1024, 1024
          %172 = vsyncadd %s165, %s171
          %s173 = smul.addr %s23, 8
          %s174 = sadd.s32 %s169, %s173
          %s175 = smul.addr %s174, 128
          %s176 = scalar_lea.hbm %s0, %s175
          %s177 = sshll.u32 %s168, 4
          %s178 = int_to_ptr.vmem [resolvable:$true] %s177
          %183 = dma.hbm_to_vmem [thread:$0]  %s176, 1024, %s178, %s165, 128, 128, 8
        $region28: #{tpu_custom_call.1} parent=23 // pred_fallthru
          _
      $region24: #{tpu_custom_call.1} parent=5 // pred_fallthru
        _
      %p184 = scmp.le.s32.totalorder 1, %s16
      %p185 = scmp.lt.s32.totalorder %s16, 3
      %p186 = pnand %p184, %p185
      %p187 = pneg %p186
      // Predicated region
      $region29: #{tpu_custom_call.1} parent=5 // pred_check
        _
      $region30: #{tpu_custom_call.1} parent=5 // pred_check_branch
        %189 = sbr.rel (%p186) target = $region32
      $region31: #{tpu_custom_call.1} parent=5 // pred_region
        %s190 = ssub.s32 %s16, 1
        %s191 = sand.u32 %s43, 1
        %s192 = scalar_lea.sflag [#allocation3], %s191
        %s193 = sand.u32 %s43, 1
        %s194 = smul.addr %s193, 64
        %s195 = scalar_lea.vmem [#allocation2], %s194
        // Predicated region
        $region33: #{tpu_custom_call.1} parent=31 // pred_check
          %p196 = pneg %p56
        $region34: #{tpu_custom_call.1} parent=31 // pred_check_branch
          %198 = sbr.rel (%p196) target = $region36
        $region35: #{tpu_custom_call.1} parent=31 // pred_region
          %199 = dma.done %s192, 1024
        $region36: #{tpu_custom_call.1} parent=31 // pred_fallthru
          _
        // Predicated region
        $region37: #{tpu_custom_call.1} parent=31 // pred_check
          %p200 = pneg %p77
        $region38: #{tpu_custom_call.1} parent=31 // pred_check_branch
          %202 = sbr.rel (%p200) target = $region40
        $region39: #{tpu_custom_call.1} parent=31 // pred_region
          %203 = dma.done [#allocation6], 4096
        $region40: #{tpu_custom_call.1} parent=31 // pred_fallthru
          _
        %s204 = sand.u32 %s43, 1
        %s205 = scalar_lea.sflag [#allocation3], %s204
        %s206 = sand.u32 %s43, 1
        %s207 = smul.addr %s206, 64
        %s208 = scalar_lea.vmem [#allocation2], %s207
        %p209 = pneg %p56
        %p210 = pneg %p53
        %p211 = pneg %p77
        %p212 = pneg %p74
        %p213 = pneg %p98
        %p214 = pneg %p95
        %p215 = pneg %p126
        %p216 = pneg %p123
        %s217 = sand.u32 %s113, 1
        %s218 = scalar_lea.sflag [#allocation4], %s217
        %s219 = sand.u32 %s113, 1
        %s220 = smul.addr %s219, 128
        %s221 = scalar_lea.vmem [#allocation7], %s220
        %s222 = smul.u32 2, %s26
        %s223 = smul.u32 2, %s26
        %v224 = vld [vmem:[%s195] sm:$0xff]
        %v225 = vld [vmem:[%s195 + $0x8] sm:$0xff]
        %v226 = vld [vmem:[#allocation5] sm:$0xff]
        %v227 = vld [vmem:[#allocation5 + $0x8] sm:$0xff]
        %v228 = vld [vmem:[#allocation5 + $0x10] sm:$0xff]
        %v229 = vld [vmem:[#allocation5 + $0x18] sm:$0xff]
        %v230 = vld [vmem:[#allocation5 + $0x20] sm:$0xff]
        %v231 = vld [vmem:[#allocation5 + $0x28] sm:$0xff]
        %v232 = vld [vmem:[#allocation5 + $0x30] sm:$0xff]
        %v233 = vld [vmem:[#allocation5 + $0x38] sm:$0xff]
        %s234 = scalar_lea.vmem %s195, 16 [#allocation2]
        %v235 = vld [vmem:[%s234] sm:$0xff]
        %v236 = vld [vmem:[%s234 + $0x8] sm:$0xff]
        %s237 = scalar_lea.vmem [#allocation5], 64
        %v238 = vld [vmem:[%s237] sm:$0xff]
        %v239 = vld [vmem:[%s237 + $0x8] sm:$0xff]
        %v240 = vld [vmem:[%s237 + $0x10] sm:$0xff]
        %v241 = vld [vmem:[%s237 + $0x18] sm:$0xff]
        %v242 = vld [vmem:[%s237 + $0x20] sm:$0xff]
        %v243 = vld [vmem:[%s237 + $0x28] sm:$0xff]
        %v244 = vld [vmem:[%s237 + $0x30] sm:$0xff]
        %v245 = vld [vmem:[%s237 + $0x38] sm:$0xff]
        %vm246 = vcmask 130048
        %v248 = vsel %vm246, %v235, 0
        %v251 = vsel %vm246, %v236, 0
        %253 = vmatprep.subr.mxu0 %v239
        %254 = vmatpush1.msra.mxu0 %v238
        %255 = vmatprep.subr.mxu0 %v243
        %256 = vmatpush1.msra.mxu0 %v242
        %257 = vmatprep.subr.mxu0 0.0
        %258 = vmatpush1.msra.mxu0 0.0
        %259 = vmatprep.subr.mxu0 0.0
        %260 = vmatpush1.msra.mxu0 0.0
        %261 = vmatprep.subr.mxu0 0.0
        %262 = vmatpush1.msra.mxu0 0.0
        %263 = vmatprep.subr.mxu0 0.0
        %264 = vmatpush1.msra.mxu0 0.0
        %265 = vmatprep.subr.mxu0 0.0
        %266 = vmatpush1.msra.mxu0 0.0
        %267 = vmatprep.subr.mxu0 0.0
        %268 = vmatpush1.msra.mxu0 0.0
        %269 = vmatprep.subr.mxu0 0.0
        %270 = vmatpush1.msra.mxu0 0.0
        %271 = vmatprep.subr.mxu0 0.0
        %272 = vmatpush1.msra.mxu0 0.0
        %273 = vmatprep.subr.mxu0 0.0
        %274 = vmatpush1.msra.mxu0 0.0
        %275 = vmatprep.subr.mxu0 0.0
        %276 = vmatpush1.msra.mxu0 0.0
        %277 = vmatprep.subr.mxu0 0.0
        %278 = vmatpush1.msra.mxu0 0.0
        %279 = vmatprep.subr.mxu0 0.0
        %280 = vmatpush1.msra.mxu0 0.0
        %281 = vmatprep.subr.mxu0 0.0
        %282 = vmatpush1.msra.mxu0 0.0
        %283 = vmatprep.subr.mxu0 0.0
        %284 = vmatpush1.msra.mxu0 0.0
        %285 = vmatprep.subr.mxu0 0.0
        %286 = vmatpush1.msra.mxu0 0.0
        %287 = vmatprep.subr.mxu0 0.0
        %288 = vmatpush1.msra.mxu0 0.0
        %289 = vmatprep.subr.mxu0 0.0
        %290 = vmatpush1.msra.mxu0 0.0
        %291 = vmatprep.subr.mxu0 0.0
        %292 = vmatpush1.msra.mxu0 0.0
        %293 = vmatprep.subr.mxu0 0.0
        %294 = vmatpush1.msra.mxu0 0.0
        %295 = vmatprep.subr.mxu0 0.0
        %296 = vmatpush1.msra.mxu0 0.0
        %297 = vmatprep.subr.mxu0 0.0
        %298 = vmatpush1.msra.mxu0 0.0
        %299 = vmatprep.subr.mxu0 0.0
        %300 = vmatpush1.msra.mxu0 0.0
        %301 = vmatprep.subr.mxu0 0.0
        %302 = vmatpush1.msra.mxu0 0.0
        %303 = vmatprep.subr.mxu0 0.0
        %304 = vmatpush1.msra.mxu0 0.0
        %305 = vmatprep.subr.mxu0 0.0
        %306 = vmatpush1.msra.mxu0 0.0
        %307 = vmatprep.subr.mxu0 0.0
        %308 = vmatpush1.msra.mxu0 0.0
        %309 = vmatprep.subr.mxu0 0.0
        %310 = vmatpush1.msra.mxu0 0.0
        %311 = vmatprep.subr.mxu0 0.0
        %312 = vmatpush1.msra.mxu0 0.0
        %313 = vmatprep.subr.mxu0 0.0
        %314 = vmatpush1.msra.mxu0 0.0
        %315 = vmatprep.subr.mxu0 0.0
        %316 = vmatpush1.msra.mxu0 0.0
        %317 = vmatprep.mubr.f32.mxu0 0.0
        %318 = vmatmul.mubr.f32.gmra.mrb[0].mxu0 %v248
        %v319 = vpop.f32.mrb[0].mxu0
        %v320 = vadd.f32 0.0, %v319
        %v321 = vpop.f32.mrb[0].mxu0
        %v322 = vadd.f32 0.0, %v321
        %323 = vmatprep.mubr.f32.mxu0 0.0
        %324 = vmatmul.mubr.f32.gmra.mrb[0].mxu0 %v251
        %v325 = vpop.f32.mrb[0].mxu0
        %v326 = vadd.f32 0.0, %v325
        %v327 = vpop.f32.mrb[0].mxu0
        %v328 = vadd.f32 0.0, %v327
        %329 = vdwg.mxu0
        %330 = vmatprep.subr.mxu0 %v241
        %331 = vmatpush1.msra.mxu0 %v240
        %332 = vmatprep.subr.mxu0 %v245
        %333 = vmatpush1.msra.mxu0 %v244
        %334 = vmatprep.subr.mxu0 0.0
        %335 = vmatpush1.msra.mxu0 0.0
        %336 = vmatprep.subr.mxu0 0.0
        %337 = vmatpush1.msra.mxu0 0.0
        %338 = vmatprep.subr.mxu0 0.0
        %339 = vmatpush1.msra.mxu0 0.0
        %340 = vmatprep.subr.mxu0 0.0
        %341 = vmatpush1.msra.mxu0 0.0
        %342 = vmatprep.subr.mxu0 0.0
        %343 = vmatpush1.msra.mxu0 0.0
        %344 = vmatprep.subr.mxu0 0.0
        %345 = vmatpush1.msra.mxu0 0.0
        %346 = vmatprep.subr.mxu0 0.0
        %347 = vmatpush1.msra.mxu0 0.0
        %348 = vmatprep.subr.mxu0 0.0
        %349 = vmatpush1.msra.mxu0 0.0
        %350 = vmatprep.subr.mxu0 0.0
        %351 = vmatpush1.msra.mxu0 0.0
        %352 = vmatprep.subr.mxu0 0.0
        %353 = vmatpush1.msra.mxu0 0.0
        %354 = vmatprep.subr.mxu0 0.0
        %355 = vmatpush1.msra.mxu0 0.0
        %356 = vmatprep.subr.mxu0 0.0
        %357 = vmatpush1.msra.mxu0 0.0
        %358 = vmatprep.subr.mxu0 0.0
        %359 = vmatpush1.msra.mxu0 0.0
        %360 = vmatprep.subr.mxu0 0.0
        %361 = vmatpush1.msra.mxu0 0.0
        %362 = vmatprep.subr.mxu0 0.0
        %363 = vmatpush1.msra.mxu0 0.0
        %364 = vmatprep.subr.mxu0 0.0
        %365 = vmatpush1.msra.mxu0 0.0
        %366 = vmatprep.subr.mxu0 0.0
        %367 = vmatpush1.msra.mxu0 0.0
        %368 = vmatprep.subr.mxu0 0.0
        %369 = vmatpush1.msra.mxu0 0.0
        %370 = vmatprep.subr.mxu0 0.0
        %371 = vmatpush1.msra.mxu0 0.0
        %372 = vmatprep.subr.mxu0 0.0
        %373 = vmatpush1.msra.mxu0 0.0
        %374 = vmatprep.subr.mxu0 0.0
        %375 = vmatpush1.msra.mxu0 0.0
        %376 = vmatprep.subr.mxu0 0.0
        %377 = vmatpush1.msra.mxu0 0.0
        %378 = vmatprep.subr.mxu0 0.0
        %379 = vmatpush1.msra.mxu0 0.0
        %380 = vmatprep.subr.mxu0 0.0
        %381 = vmatpush1.msra.mxu0 0.0
        %382 = vmatprep.subr.mxu0 0.0
        %383 = vmatpush1.msra.mxu0 0.0
        %384 = vmatprep.subr.mxu0 0.0
        %385 = vmatpush1.msra.mxu0 0.0
        %386 = vmatprep.subr.mxu0 0.0
        %387 = vmatpush1.msra.mxu0 0.0
        %388 = vmatprep.subr.mxu0 0.0
        %389 = vmatpush1.msra.mxu0 0.0
        %390 = vmatprep.subr.mxu0 0.0
        %391 = vmatpush1.msra.mxu0 0.0
        %392 = vmatprep.subr.mxu0 0.0
        %393 = vmatpush1.msra.mxu0 0.0
        %394 = vmatprep.mubr.f32.mxu0 0.0
        %395 = vmatmul.mubr.f32.gmra.mrb[0].mxu0 %v248
        %v396 = vpop.f32.mrb[0].mxu0
        %v397 = vadd.f32 0.0, %v396
        %v398 = vpop.f32.mrb[0].mxu0
        %v399 = vadd.f32 0.0, %v398
        %400 = vmatprep.mubr.f32.mxu0 0.0
        %401 = vmatmul.mubr.f32.gmra.mrb[0].mxu0 %v251
        %v402 = vpop.f32.mrb[0].mxu0
        %v403 = vadd.f32 0.0, %v402
        %v404 = vpop.f32.mrb[0].mxu0
        %v405 = vadd.f32 0.0, %v404
        %406 = vdwg.mxu0
        %v408 = vsel %vm246, %v224, 0
        %v411 = vsel %vm246, %v225, 0
        %413 = vmatprep.subr.mxu0 %v227
        %414 = vmatpush1.msra.mxu0 %v226
        %415 = vmatprep.subr.mxu0 %v231
        %416 = vmatpush1.msra.mxu0 %v230
        %417 = vmatprep.subr.mxu0 0.0
        %418 = vmatpush1.msra.mxu0 0.0
        %419 = vmatprep.subr.mxu0 0.0
        %420 = vmatpush1.msra.mxu0 0.0
        %421 = vmatprep.subr.mxu0 0.0
        %422 = vmatpush1.msra.mxu0 0.0
        %423 = vmatprep.subr.mxu0 0.0
        %424 = vmatpush1.msra.mxu0 0.0
        %425 = vmatprep.subr.mxu0 0.0
        %426 = vmatpush1.msra.mxu0 0.0
        %427 = vmatprep.subr.mxu0 0.0
        %428 = vmatpush1.msra.mxu0 0.0
        %429 = vmatprep.subr.mxu0 0.0
        %430 = vmatpush1.msra.mxu0 0.0
        %431 = vmatprep.subr.mxu0 0.0
        %432 = vmatpush1.msra.mxu0 0.0
        %433 = vmatprep.subr.mxu0 0.0
        %434 = vmatpush1.msra.mxu0 0.0
        %435 = vmatprep.subr.mxu0 0.0
        %436 = vmatpush1.msra.mxu0 0.0
        %437 = vmatprep.subr.mxu0 0.0
        %438 = vmatpush1.msra.mxu0 0.0
        %439 = vmatprep.subr.mxu0 0.0
        %440 = vmatpush1.msra.mxu0 0.0
        %441 = vmatprep.subr.mxu0 0.0
        %442 = vmatpush1.msra.mxu0 0.0
        %443 = vmatprep.subr.mxu0 0.0
        %444 = vmatpush1.msra.mxu0 0.0
        %445 = vmatprep.subr.mxu0 0.0
        %446 = vmatpush1.msra.mxu0 0.0
        %447 = vmatprep.subr.mxu0 0.0
        %448 = vmatpush1.msra.mxu0 0.0
        %449 = vmatprep.subr.mxu0 0.0
        %450 = vmatpush1.msra.mxu0 0.0
        %451 = vmatprep.subr.mxu0 0.0
        %452 = vmatpush1.msra.mxu0 0.0
        %453 = vmatprep.subr.mxu0 0.0
        %454 = vmatpush1.msra.mxu0 0.0
        %455 = vmatprep.subr.mxu0 0.0
        %456 = vmatpush1.msra.mxu0 0.0
        %457 = vmatprep.subr.mxu0 0.0
        %458 = vmatpush1.msra.mxu0 0.0
        %459 = vmatprep.subr.mxu0 0.0
        %460 = vmatpush1.msra.mxu0 0.0
        %461 = vmatprep.subr.mxu0 0.0
        %462 = vmatpush1.msra.mxu0 0.0
        %463 = vmatprep.subr.mxu0 0.0
        %464 = vmatpush1.msra.mxu0 0.0
        %465 = vmatprep.subr.mxu0 0.0
        %466 = vmatpush1.msra.mxu0 0.0
        %467 = vmatprep.subr.mxu0 0.0
        %468 = vmatpush1.msra.mxu0 0.0
        %469 = vmatprep.subr.mxu0 0.0
        %470 = vmatpush1.msra.mxu0 0.0
        %471 = vmatprep.subr.mxu0 0.0
        %472 = vmatpush1.msra.mxu0 0.0
        %473 = vmatprep.subr.mxu0 0.0
        %474 = vmatpush1.msra.mxu0 0.0
        %475 = vmatprep.subr.mxu0 0.0
        %476 = vmatpush1.msra.mxu0 0.0
        %477 = vmatprep.mubr.f32.mxu0 0.0
        %478 = vmatmul.mubr.f32.gmra.mrb[0].mxu0 %v408
        %v479 = vpop.f32.mrb[0].mxu0
        %v480 = vadd.f32 %v320, %v479
        %v481 = vpop.f32.mrb[0].mxu0
        %v482 = vadd.f32 %v322, %v481
        %483 = vmatprep.mubr.f32.mxu0 0.0
        %484 = vmatmul.mubr.f32.gmra.mrb[0].mxu0 %v411
        %v485 = vpop.f32.mrb[0].mxu0
        %v486 = vadd.f32 %v326, %v485
        %v487 = vpop.f32.mrb[0].mxu0
        %v488 = vadd.f32 %v328, %v487
        %489 = vdwg.mxu0
        %490 = vmatprep.subr.mxu0 %v229
        %491 = vmatpush1.msra.mxu0 %v228
        %492 = vmatprep.subr.mxu0 %v233
        %493 = vmatpush1.msra.mxu0 %v232
        %494 = vmatprep.subr.mxu0 0.0
        %495 = vmatpush1.msra.mxu0 0.0
        %496 = vmatprep.subr.mxu0 0.0
        %497 = vmatpush1.msra.mxu0 0.0
        %498 = vmatprep.subr.mxu0 0.0
        %499 = vmatpush1.msra.mxu0 0.0
        %500 = vmatprep.subr.mxu0 0.0
        %501 = vmatpush1.msra.mxu0 0.0
        %502 = vmatprep.subr.mxu0 0.0
        %503 = vmatpush1.msra.mxu0 0.0
        %504 = vmatprep.subr.mxu0 0.0
        %505 = vmatpush1.msra.mxu0 0.0
        %506 = vmatprep.subr.mxu0 0.0
        %507 = vmatpush1.msra.mxu0 0.0
        %508 = vmatprep.subr.mxu0 0.0
        %509 = vmatpush1.msra.mxu0 0.0
        %510 = vmatprep.subr.mxu0 0.0
        %511 = vmatpush1.msra.mxu0 0.0
        %512 = vmatprep.subr.mxu0 0.0
        %513 = vmatpush1.msra.mxu0 0.0
        %514 = vmatprep.subr.mxu0 0.0
        %515 = vmatpush1.msra.mxu0 0.0
        %516 = vmatprep.subr.mxu0 0.0
        %517 = vmatpush1.msra.mxu0 0.0
        %518 = vmatprep.subr.mxu0 0.0
        %519 = vmatpush1.msra.mxu0 0.0
        %520 = vmatprep.subr.mxu0 0.0
        %521 = vmatpush1.msra.mxu0 0.0
        %522 = vmatprep.subr.mxu0 0.0
        %523 = vmatpush1.msra.mxu0 0.0
        %524 = vmatprep.subr.mxu0 0.0
        %525 = vmatpush1.msra.mxu0 0.0
        %526 = vmatprep.subr.mxu0 0.0
        %527 = vmatpush1.msra.mxu0 0.0
        %528 = vmatprep.subr.mxu0 0.0
        %529 = vmatpush1.msra.mxu0 0.0
        %530 = vmatprep.subr.mxu0 0.0
        %531 = vmatpush1.msra.mxu0 0.0
        %532 = vmatprep.subr.mxu0 0.0
        %533 = vmatpush1.msra.mxu0 0.0
        %534 = vmatprep.subr.mxu0 0.0
        %535 = vmatpush1.msra.mxu0 0.0
        %536 = vmatprep.subr.mxu0 0.0
        %537 = vmatpush1.msra.mxu0 0.0
        %538 = vmatprep.subr.mxu0 0.0
        %539 = vmatpush1.msra.mxu0 0.0
        %540 = vmatprep.subr.mxu0 0.0
        %541 = vmatpush1.msra.mxu0 0.0
        %542 = vmatprep.subr.mxu0 0.0
        %543 = vmatpush1.msra.mxu0 0.0
        %544 = vmatprep.subr.mxu0 0.0
        %545 = vmatpush1.msra.mxu0 0.0
        %546 = vmatprep.subr.mxu0 0.0
        %547 = vmatpush1.msra.mxu0 0.0
        %548 = vmatprep.subr.mxu0 0.0
        %549 = vmatpush1.msra.mxu0 0.0
        %550 = vmatprep.subr.mxu0 0.0
        %551 = vmatpush1.msra.mxu0 0.0
        %552 = vmatprep.subr.mxu0 0.0
        %553 = vmatpush1.msra.mxu0 0.0
        %554 = vmatprep.mubr.f32.mxu0 0.0
        %555 = vmatmul.mubr.f32.gmra.mrb[0].mxu0 %v408
        %v556 = vpop.f32.mrb[0].mxu0
        %v557 = vadd.f32 %v397, %v556
        %v558 = vpop.f32.mrb[0].mxu0
        %v559 = vadd.f32 %v399, %v558
        %560 = vmatprep.mubr.f32.mxu0 0.0
        %561 = vmatmul.mubr.f32.gmra.mrb[0].mxu0 %v411
        %v562 = vpop.f32.mrb[0].mxu0
        %v563 = vadd.f32 %v403, %v562
        %v564 = vpop.f32.mrb[0].mxu0
        %v565 = vadd.f32 %v405, %v564
        %566 = vdwg.mxu0
        %s567 = scalar_lea.vmem %s195, 32 [#allocation2]
        %v568 = vld [vmem:[%s567] sm:$0xff]
        %v569 = vld [vmem:[%s567 + $0x8] sm:$0xff]
        %s570 = scalar_lea.vmem [#allocation5], 128
        %v571 = vld [vmem:[%s570] sm:$0xff]
        %v572 = vld [vmem:[%s570 + $0x8] sm:$0xff]
        %v573 = vld [vmem:[%s570 + $0x10] sm:$0xff]
        %v574 = vld [vmem:[%s570 + $0x18] sm:$0xff]
        %v575 = vld [vmem:[%s570 + $0x20] sm:$0xff]
        %v576 = vld [vmem:[%s570 + $0x28] sm:$0xff]
        %v577 = vld [vmem:[%s570 + $0x30] sm:$0xff]
        %v578 = vld [vmem:[%s570 + $0x38] sm:$0xff]
        %v580 = vsel %vm246, %v568, 0
        %v583 = vsel %vm246, %v569, 0
        %585 = vmatprep.subr.mxu0 %v572
        %586 = vmatpush1.msra.mxu0 %v571
        %587 = vmatprep.subr.mxu0 %v576
        %588 = vmatpush1.msra.mxu0 %v575
        %589 = vmatprep.subr.mxu0 0.0
        %590 = vmatpush1.msra.mxu0 0.0
        %591 = vmatprep.subr.mxu0 0.0
        %592 = vmatpush1.msra.mxu0 0.0
        %593 = vmatprep.subr.mxu0 0.0
        %594 = vmatpush1.msra.mxu0 0.0
        %595 = vmatprep.subr.mxu0 0.0
        %596 = vmatpush1.msra.mxu0 0.0
        %597 = vmatprep.subr.mxu0 0.0
        %598 = vmatpush1.msra.mxu0 0.0
        %599 = vmatprep.subr.mxu0 0.0
        %600 = vmatpush1.msra.mxu0 0.0
        %601 = vmatprep.subr.mxu0 0.0
        %602 = vmatpush1.msra.mxu0 0.0
        %603 = vmatprep.subr.mxu0 0.0
        %604 = vmatpush1.msra.mxu0 0.0
        %605 = vmatprep.subr.mxu0 0.0
        %606 = vmatpush1.msra.mxu0 0.0
        %607 = vmatprep.subr.mxu0 0.0
        %608 = vmatpush1.msra.mxu0 0.0
        %609 = vmatprep.subr.mxu0 0.0
        %610 = vmatpush1.msra.mxu0 0.0
        %611 = vmatprep.subr.mxu0 0.0
        %612 = vmatpush1.msra.mxu0 0.0
        %613 = vmatprep.subr.mxu0 0.0
        %614 = vmatpush1.msra.mxu0 0.0
        %615 = vmatprep.subr.mxu0 0.0
        %616 = vmatpush1.msra.mxu0 0.0
        %617 = vmatprep.subr.mxu0 0.0
        %618 = vmatpush1.msra.mxu0 0.0
        %619 = vmatprep.subr.mxu0 0.0
        %620 = vmatpush1.msra.mxu0 0.0
        %621 = vmatprep.subr.mxu0 0.0
        %622 = vmatpush1.msra.mxu0 0.0
        %623 = vmatprep.subr.mxu0 0.0
        %624 = vmatpush1.msra.mxu0 0.0
        %625 = vmatprep.subr.mxu0 0.0
        %626 = vmatpush1.msra.mxu0 0.0
        %627 = vmatprep.subr.mxu0 0.0
        %628 = vmatpush1.msra.mxu0 0.0
        %629 = vmatprep.subr.mxu0 0.0
        %630 = vmatpush1.msra.mxu0 0.0
        %631 = vmatprep.subr.mxu0 0.0
        %632 = vmatpush1.msra.mxu0 0.0
        %633 = vmatprep.subr.mxu0 0.0
        %634 = vmatpush1.msra.mxu0 0.0
        %635 = vmatprep.subr.mxu0 0.0
        %636 = vmatpush1.msra.mxu0 0.0
        %637 = vmatprep.subr.mxu0 0.0
        %638 = vmatpush1.msra.mxu0 0.0
        %639 = vmatprep.subr.mxu0 0.0
        %640 = vmatpush1.msra.mxu0 0.0
        %641 = vmatprep.subr.mxu0 0.0
        %642 = vmatpush1.msra.mxu0 0.0
        %643 = vmatprep.subr.mxu0 0.0
        %644 = vmatpush1.msra.mxu0 0.0
        %645 = vmatprep.subr.mxu0 0.0
        %646 = vmatpush1.msra.mxu0 0.0
        %647 = vmatprep.subr.mxu0 0.0
        %648 = vmatpush1.msra.mxu0 0.0
        %649 = vmatprep.mubr.f32.mxu0 0.0
        %650 = vmatmul.mubr.f32.gmra.mrb[0].mxu0 %v580
        %v651 = vpop.f32.mrb[0].mxu0
        %v652 = vadd.f32 0.0, %v651
        %v653 = vpop.f32.mrb[0].mxu0
        %v654 = vadd.f32 0.0, %v653
        %655 = vmatprep.mubr.f32.mxu0 0.0
        %656 = vmatmul.mubr.f32.gmra.mrb[0].mxu0 %v583
        %v657 = vpop.f32.mrb[0].mxu0
        %v658 = vadd.f32 0.0, %v657
        %v659 = vpop.f32.mrb[0].mxu0
        %v660 = vadd.f32 0.0, %v659
        %661 = vdwg.mxu0
        %662 = vmatprep.subr.mxu0 %v574
        %663 = vmatpush1.msra.mxu0 %v573
        %664 = vmatprep.subr.mxu0 %v578
        %665 = vmatpush1.msra.mxu0 %v577
        %666 = vmatprep.subr.mxu0 0.0
        %667 = vmatpush1.msra.mxu0 0.0
        %668 = vmatprep.subr.mxu0 0.0
        %669 = vmatpush1.msra.mxu0 0.0
        %670 = vmatprep.subr.mxu0 0.0
        %671 = vmatpush1.msra.mxu0 0.0
        %672 = vmatprep.subr.mxu0 0.0
        %673 = vmatpush1.msra.mxu0 0.0
        %674 = vmatprep.subr.mxu0 0.0
        %675 = vmatpush1.msra.mxu0 0.0
        %676 = vmatprep.subr.mxu0 0.0
        %677 = vmatpush1.msra.mxu0 0.0
        %678 = vmatprep.subr.mxu0 0.0
        %679 = vmatpush1.msra.mxu0 0.0
        %680 = vmatprep.subr.mxu0 0.0
        %681 = vmatpush1.msra.mxu0 0.0
        %682 = vmatprep.subr.mxu0 0.0
        %683 = vmatpush1.msra.mxu0 0.0
        %684 = vmatprep.subr.mxu0 0.0
        %685 = vmatpush1.msra.mxu0 0.0
        %686 = vmatprep.subr.mxu0 0.0
        %687 = vmatpush1.msra.mxu0 0.0
        %688 = vmatprep.subr.mxu0 0.0
        %689 = vmatpush1.msra.mxu0 0.0
        %690 = vmatprep.subr.mxu0 0.0
        %691 = vmatpush1.msra.mxu0 0.0
        %692 = vmatprep.subr.mxu0 0.0
        %693 = vmatpush1.msra.mxu0 0.0
        %694 = vmatprep.subr.mxu0 0.0
        %695 = vmatpush1.msra.mxu0 0.0
        %696 = vmatprep.subr.mxu0 0.0
        %697 = vmatpush1.msra.mxu0 0.0
        %698 = vmatprep.subr.mxu0 0.0
        %699 = vmatpush1.msra.mxu0 0.0
        %700 = vmatprep.subr.mxu0 0.0
        %701 = vmatpush1.msra.mxu0 0.0
        %702 = vmatprep.subr.mxu0 0.0
        %703 = vmatpush1.msra.mxu0 0.0
        %704 = vmatprep.subr.mxu0 0.0
        %705 = vmatpush1.msra.mxu0 0.0
        %706 = vmatprep.subr.mxu0 0.0
        %707 = vmatpush1.msra.mxu0 0.0
        %708 = vmatprep.subr.mxu0 0.0
        %709 = vmatpush1.msra.mxu0 0.0
        %710 = vmatprep.subr.mxu0 0.0
        %711 = vmatpush1.msra.mxu0 0.0
        %712 = vmatprep.subr.mxu0 0.0
        %713 = vmatpush1.msra.mxu0 0.0
        %714 = vmatprep.subr.mxu0 0.0
        %715 = vmatpush1.msra.mxu0 0.0
        %716 = vmatprep.subr.mxu0 0.0
        %717 = vmatpush1.msra.mxu0 0.0
        %718 = vmatprep.subr.mxu0 0.0
        %719 = vmatpush1.msra.mxu0 0.0
        %720 = vmatprep.subr.mxu0 0.0
        %721 = vmatpush1.msra.mxu0 0.0
        %722 = vmatprep.subr.mxu0 0.0
        %723 = vmatpush1.msra.mxu0 0.0
        %724 = vmatprep.subr.mxu0 0.0
        %725 = vmatpush1.msra.mxu0 0.0
        %726 = vmatprep.mubr.f32.mxu0 0.0
        %727 = vmatmul.mubr.f32.gmra.mrb[0].mxu0 %v580
        %v728 = vpop.f32.mrb[0].mxu0
        %v729 = vadd.f32 0.0, %v728
        %v730 = vpop.f32.mrb[0].mxu0
        %v731 = vadd.f32 0.0, %v730
        %732 = vmatprep.mubr.f32.mxu0 0.0
        %733 = vmatmul.mubr.f32.gmra.mrb[0].mxu0 %v583
        %v734 = vpop.f32.mrb[0].mxu0
        %v735 = vadd.f32 0.0, %v734
        %v736 = vpop.f32.mrb[0].mxu0
        %v737 = vadd.f32 0.0, %v736
        %738 = vdwg.mxu0
        %v739 = vadd.f32 %v480, %v652
        %v740 = vadd.f32 %v482, %v654
        %v741 = vadd.f32 %v557, %v729
        %v742 = vadd.f32 %v559, %v731
        %v743 = vadd.f32 %v486, %v658
        %v744 = vadd.f32 %v488, %v660
        %v745 = vadd.f32 %v563, %v735
        %v746 = vadd.f32 %v565, %v737
        %s747 = scalar_lea.vmem %s195, 48 [#allocation2]
        %v748 = vld [vmem:[%s747] sm:$0xff]
        %v749 = vld [vmem:[%s747 + $0x8] sm:$0xff]
        %s750 = scalar_lea.vmem [#allocation5], 192
        %v751 = vld [vmem:[%s750] sm:$0xff]
        %v752 = vld [vmem:[%s750 + $0x8] sm:$0xff]
        %v753 = vld [vmem:[%s750 + $0x10] sm:$0xff]
        %v754 = vld [vmem:[%s750 + $0x18] sm:$0xff]
        %v755 = vld [vmem:[%s750 + $0x20] sm:$0xff]
        %v756 = vld [vmem:[%s750 + $0x28] sm:$0xff]
        %v757 = vld [vmem:[%s750 + $0x30] sm:$0xff]
        %v758 = vld [vmem:[%s750 + $0x38] sm:$0xff]
        %v760 = vsel %vm246, %v748, 0
        %v763 = vsel %vm246, %v749, 0
        %765 = vmatprep.subr.mxu0 %v752
        %766 = vmatpush1.msra.mxu0 %v751
        %767 = vmatprep.subr.mxu0 %v756
        %768 = vmatpush1.msra.mxu0 %v755
        %769 = vmatprep.subr.mxu0 0.0
        %770 = vmatpush1.msra.mxu0 0.0
        %771 = vmatprep.subr.mxu0 0.0
        %772 = vmatpush1.msra.mxu0 0.0
        %773 = vmatprep.subr.mxu0 0.0
        %774 = vmatpush1.msra.mxu0 0.0
        %775 = vmatprep.subr.mxu0 0.0
        %776 = vmatpush1.msra.mxu0 0.0
        %777 = vmatprep.subr.mxu0 0.0
        %778 = vmatpush1.msra.mxu0 0.0
        %779 = vmatprep.subr.mxu0 0.0
        %780 = vmatpush1.msra.mxu0 0.0
        %781 = vmatprep.subr.mxu0 0.0
        %782 = vmatpush1.msra.mxu0 0.0
        %783 = vmatprep.subr.mxu0 0.0
        %784 = vmatpush1.msra.mxu0 0.0
        %785 = vmatprep.subr.mxu0 0.0
        %786 = vmatpush1.msra.mxu0 0.0
        %787 = vmatprep.subr.mxu0 0.0
        %788 = vmatpush1.msra.mxu0 0.0
        %789 = vmatprep.subr.mxu0 0.0
        %790 = vmatpush1.msra.mxu0 0.0
        %791 = vmatprep.subr.mxu0 0.0
        %792 = vmatpush1.msra.mxu0 0.0
        %793 = vmatprep.subr.mxu0 0.0
        %794 = vmatpush1.msra.mxu0 0.0
        %795 = vmatprep.subr.mxu0 0.0
        %796 = vmatpush1.msra.mxu0 0.0
        %797 = vmatprep.subr.mxu0 0.0
        %798 = vmatpush1.msra.mxu0 0.0
        %799 = vmatprep.subr.mxu0 0.0
        %800 = vmatpush1.msra.mxu0 0.0
        %801 = vmatprep.subr.mxu0 0.0
        %802 = vmatpush1.msra.mxu0 0.0
        %803 = vmatprep.subr.mxu0 0.0
        %804 = vmatpush1.msra.mxu0 0.0
        %805 = vmatprep.subr.mxu0 0.0
        %806 = vmatpush1.msra.mxu0 0.0
        %807 = vmatprep.subr.mxu0 0.0
        %808 = vmatpush1.msra.mxu0 0.0
        %809 = vmatprep.subr.mxu0 0.0
        %810 = vmatpush1.msra.mxu0 0.0
        %811 = vmatprep.subr.mxu0 0.0
        %812 = vmatpush1.msra.mxu0 0.0
        %813 = vmatprep.subr.mxu0 0.0
        %814 = vmatpush1.msra.mxu0 0.0
        %815 = vmatprep.subr.mxu0 0.0
        %816 = vmatpush1.msra.mxu0 0.0
        %817 = vmatprep.subr.mxu0 0.0
        %818 = vmatpush1.msra.mxu0 0.0
        %819 = vmatprep.subr.mxu0 0.0
        %820 = vmatpush1.msra.mxu0 0.0
        %821 = vmatprep.subr.mxu0 0.0
        %822 = vmatpush1.msra.mxu0 0.0
        %823 = vmatprep.subr.mxu0 0.0
        %824 = vmatpush1.msra.mxu0 0.0
        %825 = vmatprep.subr.mxu0 0.0
        %826 = vmatpush1.msra.mxu0 0.0
        %827 = vmatprep.subr.mxu0 0.0
        %828 = vmatpush1.msra.mxu0 0.0
        %829 = vmatprep.mubr.f32.mxu0 0.0
        %830 = vmatmul.mubr.f32.gmra.mrb[0].mxu0 %v760
        %v831 = vpop.f32.mrb[0].mxu0
        %v832 = vadd.f32 0.0, %v831
        %v833 = vpop.f32.mrb[0].mxu0
        %v834 = vadd.f32 0.0, %v833
        %835 = vmatprep.mubr.f32.mxu0 0.0
        %836 = vmatmul.mubr.f32.gmra.mrb[0].mxu0 %v763
        %v837 = vpop.f32.mrb[0].mxu0
        %v838 = vadd.f32 0.0, %v837
        %v839 = vpop.f32.mrb[0].mxu0
        %v840 = vadd.f32 0.0, %v839
        %841 = vdwg.mxu0
        %842 = vmatprep.subr.mxu0 %v754
        %843 = vmatpush1.msra.mxu0 %v753
        %844 = vmatprep.subr.mxu0 %v758
        %845 = vmatpush1.msra.mxu0 %v757
        %846 = vmatprep.subr.mxu0 0.0
        %847 = vmatpush1.msra.mxu0 0.0
        %848 = vmatprep.subr.mxu0 0.0
        %849 = vmatpush1.msra.mxu0 0.0
        %850 = vmatprep.subr.mxu0 0.0
        %851 = vmatpush1.msra.mxu0 0.0
        %852 = vmatprep.subr.mxu0 0.0
        %853 = vmatpush1.msra.mxu0 0.0
        %854 = vmatprep.subr.mxu0 0.0
        %855 = vmatpush1.msra.mxu0 0.0
        %856 = vmatprep.subr.mxu0 0.0
        %857 = vmatpush1.msra.mxu0 0.0
        %858 = vmatprep.subr.mxu0 0.0
        %859 = vmatpush1.msra.mxu0 0.0
        %860 = vmatprep.subr.mxu0 0.0
        %861 = vmatpush1.msra.mxu0 0.0
        %862 = vmatprep.subr.mxu0 0.0
        %863 = vmatpush1.msra.mxu0 0.0
        %864 = vmatprep.subr.mxu0 0.0
        %865 = vmatpush1.msra.mxu0 0.0
        %866 = vmatprep.subr.mxu0 0.0
        %867 = vmatpush1.msra.mxu0 0.0
        %868 = vmatprep.subr.mxu0 0.0
        %869 = vmatpush1.msra.mxu0 0.0
        %870 = vmatprep.subr.mxu0 0.0
        %871 = vmatpush1.msra.mxu0 0.0
        %872 = vmatprep.subr.mxu0 0.0
        %873 = vmatpush1.msra.mxu0 0.0
        %874 = vmatprep.subr.mxu0 0.0
        %875 = vmatpush1.msra.mxu0 0.0
        %876 = vmatprep.subr.mxu0 0.0
        %877 = vmatpush1.msra.mxu0 0.0
        %878 = vmatprep.subr.mxu0 0.0
        %879 = vmatpush1.msra.mxu0 0.0
        %880 = vmatprep.subr.mxu0 0.0
        %881 = vmatpush1.msra.mxu0 0.0
        %882 = vmatprep.subr.mxu0 0.0
        %883 = vmatpush1.msra.mxu0 0.0
        %884 = vmatprep.subr.mxu0 0.0
        %885 = vmatpush1.msra.mxu0 0.0
        %886 = vmatprep.subr.mxu0 0.0
        %887 = vmatpush1.msra.mxu0 0.0
        %888 = vmatprep.subr.mxu0 0.0
        %889 = vmatpush1.msra.mxu0 0.0
        %890 = vmatprep.subr.mxu0 0.0
        %891 = vmatpush1.msra.mxu0 0.0
        %892 = vmatprep.subr.mxu0 0.0
        %893 = vmatpush1.msra.mxu0 0.0
        %894 = vmatprep.subr.mxu0 0.0
        %895 = vmatpush1.msra.mxu0 0.0
        %896 = vmatprep.subr.mxu0 0.0
        %897 = vmatpush1.msra.mxu0 0.0
        %898 = vmatprep.subr.mxu0 0.0
        %899 = vmatpush1.msra.mxu0 0.0
        %900 = vmatprep.subr.mxu0 0.0
        %901 = vmatpush1.msra.mxu0 0.0
        %902 = vmatprep.subr.mxu0 0.0
        %903 = vmatpush1.msra.mxu0 0.0
        %904 = vmatprep.subr.mxu0 0.0
        %905 = vmatpush1.msra.mxu0 0.0
        %906 = vmatprep.mubr.f32.mxu0 0.0
        %907 = vmatmul.mubr.f32.gmra.mrb[0].mxu0 %v760
        %v908 = vpop.f32.mrb[0].mxu0
        %v909 = vadd.f32 0.0, %v908
        %v910 = vpop.f32.mrb[0].mxu0
        %v911 = vadd.f32 0.0, %v910
        %912 = vmatprep.mubr.f32.mxu0 0.0
        %913 = vmatmul.mubr.f32.gmra.mrb[0].mxu0 %v763
        %v914 = vpop.f32.mrb[0].mxu0
        %v915 = vadd.f32 0.0, %v914
        %v916 = vpop.f32.mrb[0].mxu0
        %v917 = vadd.f32 0.0, %v916
        %918 = vdwg.mxu0
        %v919 = vadd.f32 %v739, %v832
        %v920 = vadd.f32 %v740, %v834
        %v921 = vadd.f32 %v741, %v909
        %v922 = vadd.f32 %v742, %v911
        %v923 = vadd.f32 %v743, %v838
        %v924 = vadd.f32 %v744, %v840
        %v925 = vadd.f32 %v745, %v915
        %v926 = vadd.f32 %v746, %v917
        %v927 = vld [vmem:[%s2] sm:$0xf]
        %v929 = vlaneseq
        %v930 = vshrl.u32 %v929, 7
        %v931 = vsub.s32 0, %v930
        %v932 = vrot.slane %v927, %v931
        %v933 = vlaneseq
        %v934 = vshrl.u32 %v933, 7
        %v935 = vsub.s32 1, %v934
        %v936 = vrot.slane %v927, %v935
        %v937 = vlaneseq
        %v938 = vshrl.u32 %v937, 7
        %v939 = vsub.s32 2, %v938
        %v940 = vrot.slane %v927, %v939
        %v941 = vlaneseq
        %v942 = vshrl.u32 %v941, 7
        %v943 = vsub.s32 3, %v942
        %v944 = vrot.slane %v927, %v943
        %v949 = vadd.f32 %v919, %v932
        %v950 = vadd.f32 %v920, %v936
        %v951 = vadd.f32 %v921, %v940
        %v952 = vadd.f32 %v922, %v944
        %v953 = vadd.f32 %v923, %v932
        %v954 = vadd.f32 %v924, %v936
        %v955 = vadd.f32 %v925, %v940
        %v956 = vadd.f32 %v926, %v944
        %vm957 = vcmask 523264
        %958 = vst.msk [vmem:[%s221] sm:$0xff] %vm957, %v949
        %959 = vst.msk [vmem:[%s221 + $0x8] sm:$0xff] %vm957, %v953
        %962 = vrot.lane.b32.xlu0 %v949, 64
        %v963 = vpop.permute.xlu0 %962
        %964 = vrot.lane.b32.xlu0 %v953, 64
        %v965 = vpop.permute.xlu0 %964
        %s968 = scalar_lea.vmem %s221, 16 [#allocation7]
        %969 = vst.msk [vmem:[%s968] sm:$0xff] %vm957, %v963
        %970 = vst.msk [vmem:[%s968 + $0x8] sm:$0xff] %vm957, %v965
        %s971 = scalar_lea.vmem %s221, 32 [#allocation7]
        %972 = vst.msk [vmem:[%s971] sm:$0xff] %vm957, %v950
        %973 = vst.msk [vmem:[%s971 + $0x8] sm:$0xff] %vm957, %v954
        %976 = vrot.lane.b32.xlu0 %v950, 64
        %v977 = vpop.permute.xlu0 %976
        %978 = vrot.lane.b32.xlu0 %v954, 64
        %v979 = vpop.permute.xlu0 %978
        %s982 = scalar_lea.vmem %s221, 48 [#allocation7]
        %983 = vst.msk [vmem:[%s982] sm:$0xff] %vm957, %v977
        %984 = vst.msk [vmem:[%s982 + $0x8] sm:$0xff] %vm957, %v979
        %s985 = scalar_lea.vmem %s221, 64 [#allocation7]
        %986 = vst.msk [vmem:[%s985] sm:$0xff] %vm957, %v951
        %987 = vst.msk [vmem:[%s985 + $0x8] sm:$0xff] %vm957, %v955
        %990 = vrot.lane.b32.xlu0 %v951, 64
        %v991 = vpop.permute.xlu0 %990
        %992 = vrot.lane.b32.xlu0 %v955, 64
        %v993 = vpop.permute.xlu0 %992
        %s996 = scalar_lea.vmem %s221, 80 [#allocation7]
        %997 = vst.msk [vmem:[%s996] sm:$0xff] %vm957, %v991
        %998 = vst.msk [vmem:[%s996 + $0x8] sm:$0xff] %vm957, %v993
        %s999 = scalar_lea.vmem %s221, 96 [#allocation7]
        %1000 = vst.msk [vmem:[%s999] sm:$0xff] %vm957, %v952
        %1001 = vst.msk [vmem:[%s999 + $0x8] sm:$0xff] %vm957, %v956
        %1004 = vrot.lane.b32.xlu0 %v952, 64
        %v1005 = vpop.permute.xlu0 %1004
        %1006 = vrot.lane.b32.xlu0 %v956, 64
        %v1007 = vpop.permute.xlu0 %1006
        %s1010 = scalar_lea.vmem %s221, 112 [#allocation7]
        %1011 = vst.msk [vmem:[%s1010] sm:$0xff] %vm957, %v1005
        %1012 = vst.msk [vmem:[%s1010 + $0x8] sm:$0xff] %vm957, %v1007
        %s1013 = sand.u32 %s113, 1
        %s1014 = scalar_lea.sflag [#allocation4], %s1013
        %s1015 = sand.u32 %s113, 1
        %s1016 = smul.addr %s1015, 128
        %s1017 = scalar_lea.vmem [#allocation7], %s1016
        // Predicated region
        $region41: #{tpu_custom_call.1} parent=31 // pred_check
          %p1018 = pneg %p123
        $region42: #{tpu_custom_call.1} parent=31 // pred_check_branch
          %1020 = sbr.rel (%p1018) target = $region44
        $region43: #{tpu_custom_call.1} parent=31 // pred_region
          %s1021 = smul.u32 2, %s26
          %s1023 = ssub.s32 2048, 2048
          %1024 = vsyncadd %s1014, %s1023
          %s1025 = smul.addr %s25, 16
          %s1026 = sadd.s32 %s1021, %s1025
          %s1027 = smul.addr %s1026, 128
          %s1028 = scalar_lea.hbm %s3, %s1027
          %s1029 = sshll.u32 %s1017, 4
          %s1030 = int_to_ptr.vmem [resolvable:$true] %s1029
          %1035 = dma.vmem_to_hbm [thread:$0]  %s1030, 2048, %s1028, %s1014, 128, 128, 8
        $region44: #{tpu_custom_call.1} parent=31 // pred_fallthru
          _
      $region32: #{tpu_custom_call.1} parent=5 // pred_fallthru
        _
      %p1036 = scmp.le.s32.totalorder 2, %s16
      // Predicated region
      $region45: #{tpu_custom_call.1} parent=5 // pred_check
        %p1037 = pneg %p1036
      $region46: #{tpu_custom_call.1} parent=5 // pred_check_branch
        %1039 = sbr.rel (%p1037) target = $region48
      $region47: #{tpu_custom_call.1} parent=5 // pred_region
        %s1040 = ssub.s32 %s16, 2
        // Predicated region
        $region49: #{tpu_custom_call.1} parent=47 // pred_check
          %p1041 = pneg %p129
        $region50: #{tpu_custom_call.1} parent=47 // pred_check_branch
          %1043 = sbr.rel (%p1041) target = $region52
        $region51: #{tpu_custom_call.1} parent=47 // pred_region
          %s1044 = sand.u32 %s114, 1
          %s1045 = scalar_lea.sflag [#allocation4], %s1044
          %s1046 = sand.u32 %s114, 1
          %s1047 = smul.addr %s1046, 128
          %s1048 = scalar_lea.vmem [#allocation7], %s1047
          %1049 = dma.done %s1045, 2048
        $region52: #{tpu_custom_call.1} parent=47 // pred_fallthru
          _
      $region48: #{tpu_custom_call.1} parent=5 // pred_fallthru
        _
    $region6: #{tpu_custom_call.1} parent=1 // loop_footer
      %s20 = sadd.s32 1, %s16
    $region7: #{tpu_custom_call.1} parent=1 // loop_footer_branch
      %15 = sbr.rel target = $region3
    $region8: #{tpu_custom_call.1} parent=1 // loop_exit
      _
    %1050 = vsyncpa [#allocation3], 1
    %s1051 = scalar_lea.sflag [#allocation3], 1
    %1052 = vsyncpa %s1051, 1
    %1053 = vsyncpa [#allocation6], 1
    %1054 = vsyncpa [#allocation4], 1
    %s1055 = scalar_lea.sflag [#allocation4], 1
    %1056 = vsyncpa %s1055, 1

</llo_original>
